<compile_context>
chip_gen: v7x
topology: tpu7x:2x2x1
jax: 0.10.0
libtpu: 0.0.40
codegen_flags: <defaults>
</compile_context>

<pallas_src>
import functools

import jax
import jax.numpy as jnp
from jax import lax
from jax.experimental import pallas as pl
from jax.experimental.pallas import tpu as pltpu

D_IN, D_HID, D_OUT = 4, 6, 3
_LANES = 128      # vreg lane width
_SUBLANES = 8     # f32 vreg sublane height


def _round_up(n, m):
    return ((n + m - 1) // m) * m


def _mlp_kernel(w1_ref, b1_ref, w2_ref, b2_ref, x_ref, o_ref):
    """One batch tile, feature-major, fully (8,128)-dense.

    w1_ref: (D_HID, D_IN)   f32 SMEM   (torch layout [out, in])
    b1_ref: (D_HID,)        f32 SMEM
    w2_ref: (D_OUT, D_HID)  f32 SMEM
    b2_ref: (D_OUT,)        f32 SMEM
    x_ref : (D_IN,  S, 128) f32 VMEM   (S sublane-rows of 128 batch columns)
    o_ref : (D_OUT, S, 128) f32 VMEM
    """
    S = x_ref.shape[1]

    # Hoist every scalar weight/bias read out of the chunk loop: loop-invariant,
    # kept in sregs, so the scalar-load slots stay off the critical path.
    w1 = [[w1_ref[j, k] for k in range(D_IN)] for j in range(D_HID)]
    b1 = [b1_ref[j] for j in range(D_HID)]
    w2 = [[w2_ref[i, j] for j in range(D_HID)] for i in range(D_OUT)]
    b2 = [b2_ref[i] for i in range(D_OUT)]

    # Inner chunk = 1-2 dense vregs per feature row (1024-2048 batch columns):
    # live set ~= 4 x-rows + 3 accumulators + 1 hidden row + temps ~ 25 vregs.
    ch = 16 if S % 16 == 0 else 8
    n_chunks = S // ch

    def do_chunk(row0):
        rows = pl.ds(row0, ch)
        xk = [x_ref[k, rows, :] for k in range(D_IN)]          # D_IN x (ch, 128)
        acc = [None] * D_OUT
        # Fused layers: each hidden unit is folded into the three output
        # accumulators as soon as it is computed (no h-list kept live).
        for j in range(D_HID):
            h = xk[0] * w1[j][0]
            for k in range(1, D_IN):
                h = h + xk[k] * w1[j][k]
            h = jnp.maximum(h + b1[j], 0.0)
            for i in range(D_OUT):
                contrib = h * w2[i][j]
                acc[i] = contrib if acc[i] is None else acc[i] + contrib
        for i in range(D_OUT):
            o_ref[i, rows, :] = acc[i] + b2[i]                 # dense (8,128) stores

    if n_chunks <= 4:
        # Short tile: full static unroll (maximum LLO scheduling freedom).
        for c in range(n_chunks):
            do_chunk(c * ch)
    else:
        def body(c, carry):
            do_chunk(pl.multiple_of(c * ch, ch))
            return carry
        lax.fori_loop(0, n_chunks, body, 0)


def _block_rows(s_total, tile_b):
    """Grid-block sublane-row count (each row = 128 batch columns)."""
    s_want = max(_SUBLANES, (tile_b // _LANES) // _SUBLANES * _SUBLANES)
    if s_want >= s_total:
        # Whole batch fits one wanted tile; still split into two grid steps when
        # legal so v7x's 2 TensorCores both get work.
        if s_total >= 2 * _SUBLANES and (s_total // 2) % _SUBLANES == 0:
            return s_total // 2
        return s_total
    return s_want


def mlp_forward_fm(x_fm, w1, b1, w2, b2, *, tile_b=65536):
    """Feature-major MLP (production path, no layout plumbing).

    x_fm: (D_IN, S, 128) f32, columns = batch.  Returns (D_OUT, S, 128) f32.
    """
    d_in, s_total, lanes = x_fm.shape
    assert d_in == D_IN and lanes == _LANES and s_total % _SUBLANES == 0
    s_blk = _block_rows(s_total, tile_b)
    grid = (pl.cdiv(s_total, s_blk),)
    smem = pl.BlockSpec(memory_space=pltpu.MemorySpace.SMEM)
    return pl.pallas_call(
        _mlp_kernel,
        out_shape=jax.ShapeDtypeStruct((D_OUT, s_total, _LANES), jnp.float32),
        grid=grid,
        in_specs=[
            smem,                                               # w1 (6,4)
            smem,                                               # b1 (6,)
            smem,                                               # w2 (3,6)
            smem,                                               # b2 (3,)
            pl.BlockSpec((D_IN, s_blk, _LANES), lambda i: (0, i, 0)),
        ],
        out_specs=pl.BlockSpec((D_OUT, s_blk, _LANES), lambda i: (0, i, 0)),
        compiler_params=pltpu.CompilerParams(
            dimension_semantics=("parallel",),
        ),
    )(w1, b1, w2, b2, x_fm)


@functools.partial(jax.jit, static_argnames=("tile_b",))
def mlp_forward(x, w1, b1, w2, b2, *, tile_b=65536):
    """Torch-signature wrapper: x (B, 4) f32 -> (B, 3) f32.

    The (B,4)<->(features,cols) conversion at this boundary is the only layout
    plumbing left; keep activations feature-major and call mlp_forward_fm to
    avoid it entirely.
    """
    B = x.shape[0]
    b_pad = _round_up(B, _SUBLANES * _LANES)                    # multiple of 1024
    x_fm = jnp.pad(x.astype(jnp.float32), ((0, b_pad - B), (0, 0))).T
    x_fm = x_fm.reshape(D_IN, b_pad // _LANES, _LANES)          # free (row-major) reshape
    y_fm = mlp_forward_fm(x_fm, w1, b1, w2, b2, tile_b=tile_b)
    return y_fm.reshape(D_OUT, b_pad).T[:B]                     # drop padded columns


def init_params(key):
    """nn.Linear-style U(-1/sqrt(fan_in), 1/sqrt(fan_in)) init, torch [out, in] layout."""
    k1, k2, k3, k4 = jax.random.split(key, 4)
    bnd1 = 1.0 / (D_IN ** 0.5)
    bnd2 = 1.0 / (D_HID ** 0.5)
    w1 = jax.random.uniform(k1, (D_HID, D_IN), jnp.float32, -bnd1, bnd1)
    b1 = jax.random.uniform(k2, (D_HID,), jnp.float32, -bnd1, bnd1)
    w2 = jax.random.uniform(k3, (D_OUT, D_HID), jnp.float32, -bnd2, bnd2)
    b2 = jax.random.uniform(k4, (D_OUT,), jnp.float32, -bnd2, bnd2)
    return w1, b1, w2, b2


if __name__ == "__main__":
    key = jax.random.PRNGKey(0)
    k_x1, k_x2, k_p = jax.random.split(key, 3)
    w1, b1, w2, b2 = init_params(k_p)

    def ref_fn(x):
        h = jnp.maximum(x @ w1.T + b1, 0.0)
        return h @ w2.T + b2

    # Case 1: multi-step grid + in-kernel fori_loop chunking (default tile).
    x1 = jax.random.normal(k_x1, (10240, D_IN), dtype=jnp.float32)
    y1 = jax.block_until_ready(mlp_forward(x1, w1, b1, w2, b2))
    assert y1.shape == (10240, D_OUT)
    err1 = float(jnp.max(jnp.abs(y1 - ref_fn(x1))))
    assert jnp.allclose(y1, ref_fn(x1), atol=1e-5, rtol=1e-5), err1

    # Case 2: small explicit tile -> many pipelined grid steps.
    y1b = jax.block_until_ready(mlp_forward(x1, w1, b1, w2, b2, tile_b=1024))
    assert jnp.allclose(y1b, ref_fn(x1), atol=1e-5, rtol=1e-5)

    # Case 3: ragged batch (exercises padding + trailing-column slicing).
    x2 = jax.random.normal(k_x2, (300, D_IN), dtype=jnp.float32)
    y2 = jax.block_until_ready(mlp_forward(x2, w1, b1, w2, b2))
    assert y2.shape == (300, D_OUT)
    assert jnp.allclose(y2, ref_fn(x2), atol=1e-5, rtol=1e-5)

    print("KERNEL_OK")
</pallas_src>

<mosaic_0001>
module attributes {stable_mosaic.version = 11 : i64} {
  func.func @_mlp_kernel(%arg0: i32, %arg1: memref<6x4xf32, #tpu.memory_space<smem>>, %arg2: memref<6xf32, #tpu.memory_space<smem>>, %arg3: memref<3x6xf32, #tpu.memory_space<smem>>, %arg4: memref<3xf32, #tpu.memory_space<smem>>, %arg5: memref<4x40x128xf32, #tpu.memory_space<vmem>>, %arg6: memref<3x40x128xf32, #tpu.memory_space<vmem>>) attributes {dimension_semantics = [#tpu.dimension_semantics<parallel>], iteration_bounds = array<i64: 2>, scalar_prefetch = 0 : i64, scratch_operands = 0 : i64, tpu.core_type = #tpu.core_type<tc>, window_params = [{transform_indices = @transform_0, window_bounds = array<i64: 6, 4>}, {transform_indices = @transform_1, window_bounds = array<i64: 6>}, {transform_indices = @transform_2, window_bounds = array<i64: 3, 6>}, {transform_indices = @transform_3, window_bounds = array<i64: 3>}, {transform_indices = @transform_4, window_bounds = array<i64: 4, 40, 128>}, {transform_indices = @transform_5, window_bounds = array<i64: 3, 40, 128>}]} {
    %c0 = arith.constant 0 : index
    %c0_0 = arith.constant 0 : index
    %0 = memref.load %arg1[%c0, %c0_0] : memref<6x4xf32, #tpu.memory_space<smem>>
    %c0_1 = arith.constant 0 : index
    %c1 = arith.constant 1 : index
    %1 = memref.load %arg1[%c0_1, %c1] : memref<6x4xf32, #tpu.memory_space<smem>>
    %c0_2 = arith.constant 0 : index
    %c2 = arith.constant 2 : index
    %2 = memref.load %arg1[%c0_2, %c2] : memref<6x4xf32, #tpu.memory_space<smem>>
    %c0_3 = arith.constant 0 : index
    %c3 = arith.constant 3 : index
    %3 = memref.load %arg1[%c0_3, %c3] : memref<6x4xf32, #tpu.memory_space<smem>>
    %c1_4 = arith.constant 1 : index
    %c0_5 = arith.constant 0 : index
    %4 = memref.load %arg1[%c1_4, %c0_5] : memref<6x4xf32, #tpu.memory_space<smem>>
    %c1_6 = arith.constant 1 : index
    %c1_7 = arith.constant 1 : index
    %5 = memref.load %arg1[%c1_6, %c1_7] : memref<6x4xf32, #tpu.memory_space<smem>>
    %c1_8 = arith.constant 1 : index
    %c2_9 = arith.constant 2 : index
    %6 = memref.load %arg1[%c1_8, %c2_9] : memref<6x4xf32, #tpu.memory_space<smem>>
    %c1_10 = arith.constant 1 : index
    %c3_11 = arith.constant 3 : index
    %7 = memref.load %arg1[%c1_10, %c3_11] : memref<6x4xf32, #tpu.memory_space<smem>>
    %c2_12 = arith.constant 2 : index
    %c0_13 = arith.constant 0 : index
    %8 = memref.load %arg1[%c2_12, %c0_13] : memref<6x4xf32, #tpu.memory_space<smem>>
    %c2_14 = arith.constant 2 : index
    %c1_15 = arith.constant 1 : index
    %9 = memref.load %arg1[%c2_14, %c1_15] : memref<6x4xf32, #tpu.memory_space<smem>>
    %c2_16 = arith.constant 2 : index
    %c2_17 = arith.constant 2 : index
    %10 = memref.load %arg1[%c2_16, %c2_17] : memref<6x4xf32, #tpu.memory_space<smem>>
    %c2_18 = arith.constant 2 : index
    %c3_19 = arith.constant 3 : index
    %11 = memref.load %arg1[%c2_18, %c3_19] : memref<6x4xf32, #tpu.memory_space<smem>>
    %c3_20 = arith.constant 3 : index
    %c0_21 = arith.constant 0 : index
    %12 = memref.load %arg1[%c3_20, %c0_21] : memref<6x4xf32, #tpu.memory_space<smem>>
    %c3_22 = arith.constant 3 : index
    %c1_23 = arith.constant 1 : index
    %13 = memref.load %arg1[%c3_22, %c1_23] : memref<6x4xf32, #tpu.memory_space<smem>>
    %c3_24 = arith.constant 3 : index
    %c2_25 = arith.constant 2 : index
    %14 = memref.load %arg1[%c3_24, %c2_25] : memref<6x4xf32, #tpu.memory_space<smem>>
    %c3_26 = arith.constant 3 : index
    %c3_27 = arith.constant 3 : index
    %15 = memref.load %arg1[%c3_26, %c3_27] : memref<6x4xf32, #tpu.memory_space<smem>>
    %c4 = arith.constant 4 : index
    %c0_28 = arith.constant 0 : index
    %16 = memref.load %arg1[%c4, %c0_28] : memref<6x4xf32, #tpu.memory_space<smem>>
    %c4_29 = arith.constant 4 : index
    %c1_30 = arith.constant 1 : index
    %17 = memref.load %arg1[%c4_29, %c1_30] : memref<6x4xf32, #tpu.memory_space<smem>>
    %c4_31 = arith.constant 4 : index
    %c2_32 = arith.constant 2 : index
    %18 = memref.load %arg1[%c4_31, %c2_32] : memref<6x4xf32, #tpu.memory_space<smem>>
    %c4_33 = arith.constant 4 : index
    %c3_34 = arith.constant 3 : index
    %19 = memref.load %arg1[%c4_33, %c3_34] : memref<6x4xf32, #tpu.memory_space<smem>>
    %c5 = arith.constant 5 : index
    %c0_35 = arith.constant 0 : index
    %20 = memref.load %arg1[%c5, %c0_35] : memref<6x4xf32, #tpu.memory_space<smem>>
    %c5_36 = arith.constant 5 : index
    %c1_37 = arith.constant 1 : index
    %21 = memref.load %arg1[%c5_36, %c1_37] : memref<6x4xf32, #tpu.memory_space<smem>>
    %c5_38 = arith.constant 5 : index
    %c2_39 = arith.constant 2 : index
    %22 = memref.load %arg1[%c5_38, %c2_39] : memref<6x4xf32, #tpu.memory_space<smem>>
    %c5_40 = arith.constant 5 : index
    %c3_41 = arith.constant 3 : index
    %23 = memref.load %arg1[%c5_40, %c3_41] : memref<6x4xf32, #tpu.memory_space<smem>>
    %c0_42 = arith.constant 0 : index
    %24 = memref.load %arg2[%c0_42] : memref<6xf32, #tpu.memory_space<smem>>
    %c1_43 = arith.constant 1 : index
    %25 = memref.load %arg2[%c1_43] : memref<6xf32, #tpu.memory_space<smem>>
    %c2_44 = arith.constant 2 : index
    %26 = memref.load %arg2[%c2_44] : memref<6xf32, #tpu.memory_space<smem>>
    %c3_45 = arith.constant 3 : index
    %27 = memref.load %arg2[%c3_45] : memref<6xf32, #tpu.memory_space<smem>>
    %c4_46 = arith.constant 4 : index
    %28 = memref.load %arg2[%c4_46] : memref<6xf32, #tpu.memory_space<smem>>
    %c5_47 = arith.constant 5 : index
    %29 = memref.load %arg2[%c5_47] : memref<6xf32, #tpu.memory_space<smem>>
    %c0_48 = arith.constant 0 : index
    %c0_49 = arith.constant 0 : index
    %30 = memref.load %arg3[%c0_48, %c0_49] : memref<3x6xf32, #tpu.memory_space<smem>>
    %c0_50 = arith.constant 0 : index
    %c1_51 = arith.constant 1 : index
    %31 = memref.load %arg3[%c0_50, %c1_51] : memref<3x6xf32, #tpu.memory_space<smem>>
    %c0_52 = arith.constant 0 : index
    %c2_53 = arith.constant 2 : index
    %32 = memref.load %arg3[%c0_52, %c2_53] : memref<3x6xf32, #tpu.memory_space<smem>>
    %c0_54 = arith.constant 0 : index
    %c3_55 = arith.constant 3 : index
    %33 = memref.load %arg3[%c0_54, %c3_55] : memref<3x6xf32, #tpu.memory_space<smem>>
    %c0_56 = arith.constant 0 : index
    %c4_57 = arith.constant 4 : index
    %34 = memref.load %arg3[%c0_56, %c4_57] : memref<3x6xf32, #tpu.memory_space<smem>>
    %c0_58 = arith.constant 0 : index
    %c5_59 = arith.constant 5 : index
    %35 = memref.load %arg3[%c0_58, %c5_59] : memref<3x6xf32, #tpu.memory_space<smem>>
    %c1_60 = arith.constant 1 : index
    %c0_61 = arith.constant 0 : index
    %36 = memref.load %arg3[%c1_60, %c0_61] : memref<3x6xf32, #tpu.memory_space<smem>>
    %c1_62 = arith.constant 1 : index
    %c1_63 = arith.constant 1 : index
    %37 = memref.load %arg3[%c1_62, %c1_63] : memref<3x6xf32, #tpu.memory_space<smem>>
    %c1_64 = arith.constant 1 : index
    %c2_65 = arith.constant 2 : index
    %38 = memref.load %arg3[%c1_64, %c2_65] : memref<3x6xf32, #tpu.memory_space<smem>>
    %c1_66 = arith.constant 1 : index
    %c3_67 = arith.constant 3 : index
    %39 = memref.load %arg3[%c1_66, %c3_67] : memref<3x6xf32, #tpu.memory_space<smem>>
    %c1_68 = arith.constant 1 : index
    %c4_69 = arith.constant 4 : index
    %40 = memref.load %arg3[%c1_68, %c4_69] : memref<3x6xf32, #tpu.memory_space<smem>>
    %c1_70 = arith.constant 1 : index
    %c5_71 = arith.constant 5 : index
    %41 = memref.load %arg3[%c1_70, %c5_71] : memref<3x6xf32, #tpu.memory_space<smem>>
    %c2_72 = arith.constant 2 : index
    %c0_73 = arith.constant 0 : index
    %42 = memref.load %arg3[%c2_72, %c0_73] : memref<3x6xf32, #tpu.memory_space<smem>>
    %c2_74 = arith.constant 2 : index
    %c1_75 = arith.constant 1 : index
    %43 = memref.load %arg3[%c2_74, %c1_75] : memref<3x6xf32, #tpu.memory_space<smem>>
    %c2_76 = arith.constant 2 : index
    %c2_77 = arith.constant 2 : index
    %44 = memref.load %arg3[%c2_76, %c2_77] : memref<3x6xf32, #tpu.memory_space<smem>>
    %c2_78 = arith.constant 2 : index
    %c3_79 = arith.constant 3 : index
    %45 = memref.load %arg3[%c2_78, %c3_79] : memref<3x6xf32, #tpu.memory_space<smem>>
    %c2_80 = arith.constant 2 : index
    %c4_81 = arith.constant 4 : index
    %46 = memref.load %arg3[%c2_80, %c4_81] : memref<3x6xf32, #tpu.memory_space<smem>>
    %c2_82 = arith.constant 2 : index
    %c5_83 = arith.constant 5 : index
    %47 = memref.load %arg3[%c2_82, %c5_83] : memref<3x6xf32, #tpu.memory_space<smem>>
    %c0_84 = arith.constant 0 : index
    %48 = memref.load %arg4[%c0_84] : memref<3xf32, #tpu.memory_space<smem>>
    %c1_85 = arith.constant 1 : index
    %49 = memref.load %arg4[%c1_85] : memref<3xf32, #tpu.memory_space<smem>>
    %c2_86 = arith.constant 2 : index
    %50 = memref.load %arg4[%c2_86] : memref<3xf32, #tpu.memory_space<smem>>
    %c0_i32 = arith.constant 0 : i32
    %c5_i32 = arith.constant 5 : i32
    %51 = arith.addi %c0_i32, %c5_i32 : i32
    %c1_i32 = arith.constant 1 : i32
    scf.for %arg7 = %c0_i32 to %51 step %c1_i32  : i32 {
      %c8_i32 = arith.constant 8 : i32
      %52 = arith.muli %arg7, %c8_i32 : i32
      %53 = tpu.assume_multiple %52, 8 : i32
      %c0_88 = arith.constant 0 : index
      %54 = arith.index_cast %53 : i32 to index
      %c0_89 = arith.constant 0 : index
      %55 = vector.load %arg5[%c0_88, %54, %c0_89] : memref<4x40x128xf32, #tpu.memory_space<vmem>>, vector<1x8x128xf32>
      %56 = vector.shape_cast %55 : vector<1x8x128xf32> to vector<8x128xf32>
      %c1_90 = arith.constant 1 : index
      %57 = arith.index_cast %53 : i32 to index
      %c0_91 = arith.constant 0 : index
      %58 = vector.load %arg5[%c1_90, %57, %c0_91] : memref<4x40x128xf32, #tpu.memory_space<vmem>>, vector<1x8x128xf32>
      %59 = vector.shape_cast %58 : vector<1x8x128xf32> to vector<8x128xf32>
      %c2_92 = arith.constant 2 : index
      %60 = arith.index_cast %53 : i32 to index
      %c0_93 = arith.constant 0 : index
      %61 = vector.load %arg5[%c2_92, %60, %c0_93] : memref<4x40x128xf32, #tpu.memory_space<vmem>>, vector<1x8x128xf32>
      %62 = vector.shape_cast %61 : vector<1x8x128xf32> to vector<8x128xf32>
      %c3_94 = arith.constant 3 : index
      %63 = arith.index_cast %53 : i32 to index
      %c0_95 = arith.constant 0 : index
      %64 = vector.load %arg5[%c3_94, %63, %c0_95] : memref<4x40x128xf32, #tpu.memory_space<vmem>>, vector<1x8x128xf32>
      %65 = vector.shape_cast %64 : vector<1x8x128xf32> to vector<8x128xf32>
      %66 = vector.broadcast %0 : f32 to vector<8x128xf32>
      %67 = arith.mulf %56, %66 : vector<8x128xf32>
      %68 = vector.broadcast %1 : f32 to vector<8x128xf32>
      %69 = arith.mulf %59, %68 : vector<8x128xf32>
      %70 = arith.addf %67, %69 : vector<8x128xf32>
      %71 = vector.broadcast %2 : f32 to vector<8x128xf32>
      %72 = arith.mulf %62, %71 : vector<8x128xf32>
      %73 = arith.addf %70, %72 : vector<8x128xf32>
      %74 = vector.broadcast %3 : f32 to vector<8x128xf32>
      %75 = arith.mulf %65, %74 : vector<8x128xf32>
      %76 = arith.addf %73, %75 : vector<8x128xf32>
      %77 = vector.broadcast %24 : f32 to vector<8x128xf32>
      %78 = arith.addf %76, %77 : vector<8x128xf32>
      %cst = arith.constant 0.000000e+00 : f32
      %79 = vector.broadcast %cst : f32 to vector<8x128xf32>
      %80 = arith.maximumf %78, %79 : vector<8x128xf32>
      %81 = vector.broadcast %30 : f32 to vector<8x128xf32>
      %82 = arith.mulf %80, %81 : vector<8x128xf32>
      %83 = vector.broadcast %36 : f32 to vector<8x128xf32>
      %84 = arith.mulf %80, %83 : vector<8x128xf32>
      %85 = vector.broadcast %42 : f32 to vector<8x128xf32>
      %86 = arith.mulf %80, %85 : vector<8x128xf32>
      %87 = vector.broadcast %4 : f32 to vector<8x128xf32>
      %88 = arith.mulf %56, %87 : vector<8x128xf32>
      %89 = vector.broadcast %5 : f32 to vector<8x128xf32>
      %90 = arith.mulf %59, %89 : vector<8x128xf32>
      %91 = arith.addf %88, %90 : vector<8x128xf32>
      %92 = vector.broadcast %6 : f32 to vector<8x128xf32>
      %93 = arith.mulf %62, %92 : vector<8x128xf32>
      %94 = arith.addf %91, %93 : vector<8x128xf32>
      %95 = vector.broadcast %7 : f32 to vector<8x128xf32>
      %96 = arith.mulf %65, %95 : vector<8x128xf32>
      %97 = arith.addf %94, %96 : vector<8x128xf32>
      %98 = vector.broadcast %25 : f32 to vector<8x128xf32>
      %99 = arith.addf %97, %98 : vector<8x128xf32>
      %cst_96 = arith.constant 0.000000e+00 : f32
      %100 = vector.broadcast %cst_96 : f32 to vector<8x128xf32>
      %101 = arith.maximumf %99, %100 : vector<8x128xf32>
      %102 = vector.broadcast %31 : f32 to vector<8x128xf32>
      %103 = arith.mulf %101, %102 : vector<8x128xf32>
      %104 = arith.addf %82, %103 : vector<8x128xf32>
      %105 = vector.broadcast %37 : f32 to vector<8x128xf32>
      %106 = arith.mulf %101, %105 : vector<8x128xf32>
      %107 = arith.addf %84, %106 : vector<8x128xf32>
      %108 = vector.broadcast %43 : f32 to vector<8x128xf32>
      %109 = arith.mulf %101, %108 : vector<8x128xf32>
      %110 = arith.addf %86, %109 : vector<8x128xf32>
      %111 = vector.broadcast %8 : f32 to vector<8x128xf32>
      %112 = arith.mulf %56, %111 : vector<8x128xf32>
      %113 = vector.broadcast %9 : f32 to vector<8x128xf32>
      %114 = arith.mulf %59, %113 : vector<8x128xf32>
      %115 = arith.addf %112, %114 : vector<8x128xf32>
      %116 = vector.broadcast %10 : f32 to vector<8x128xf32>
      %117 = arith.mulf %62, %116 : vector<8x128xf32>
      %118 = arith.addf %115, %117 : vector<8x128xf32>
      %119 = vector.broadcast %11 : f32 to vector<8x128xf32>
      %120 = arith.mulf %65, %119 : vector<8x128xf32>
      %121 = arith.addf %118, %120 : vector<8x128xf32>
      %122 = vector.broadcast %26 : f32 to vector<8x128xf32>
      %123 = arith.addf %121, %122 : vector<8x128xf32>
      %cst_97 = arith.constant 0.000000e+00 : f32
      %124 = vector.broadcast %cst_97 : f32 to vector<8x128xf32>
      %125 = arith.maximumf %123, %124 : vector<8x128xf32>
      %126 = vector.broadcast %32 : f32 to vector<8x128xf32>
      %127 = arith.mulf %125, %126 : vector<8x128xf32>
      %128 = arith.addf %104, %127 : vector<8x128xf32>
      %129 = vector.broadcast %38 : f32 to vector<8x128xf32>
      %130 = arith.mulf %125, %129 : vector<8x128xf32>
      %131 = arith.addf %107, %130 : vector<8x128xf32>
      %132 = vector.broadcast %44 : f32 to vector<8x128xf32>
      %133 = arith.mulf %125, %132 : vector<8x128xf32>
      %134 = arith.addf %110, %133 : vector<8x128xf32>
      %135 = vector.broadcast %12 : f32 to vector<8x128xf32>
      %136 = arith.mulf %56, %135 : vector<8x128xf32>
      %137 = vector.broadcast %13 : f32 to vector<8x128xf32>
      %138 = arith.mulf %59, %137 : vector<8x128xf32>
      %139 = arith.addf %136, %138 : vector<8x128xf32>
      %140 = vector.broadcast %14 : f32 to vector<8x128xf32>
      %141 = arith.mulf %62, %140 : vector<8x128xf32>
      %142 = arith.addf %139, %141 : vector<8x128xf32>
      %143 = vector.broadcast %15 : f32 to vector<8x128xf32>
      %144 = arith.mulf %65, %143 : vector<8x128xf32>
      %145 = arith.addf %142, %144 : vector<8x128xf32>
      %146 = vector.broadcast %27 : f32 to vector<8x128xf32>
      %147 = arith.addf %145, %146 : vector<8x128xf32>
      %cst_98 = arith.constant 0.000000e+00 : f32
      %148 = vector.broadcast %cst_98 : f32 to vector<8x128xf32>
      %149 = arith.maximumf %147, %148 : vector<8x128xf32>
      %150 = vector.broadcast %33 : f32 to vector<8x128xf32>
      %151 = arith.mulf %149, %150 : vector<8x128xf32>
      %152 = arith.addf %128, %151 : vector<8x128xf32>
      %153 = vector.broadcast %39 : f32 to vector<8x128xf32>
      %154 = arith.mulf %149, %153 : vector<8x128xf32>
      %155 = arith.addf %131, %154 : vector<8x128xf32>
      %156 = vector.broadcast %45 : f32 to vector<8x128xf32>
      %157 = arith.mulf %149, %156 : vector<8x128xf32>
      %158 = arith.addf %134, %157 : vector<8x128xf32>
      %159 = vector.broadcast %16 : f32 to vector<8x128xf32>
      %160 = arith.mulf %56, %159 : vector<8x128xf32>
      %161 = vector.broadcast %17 : f32 to vector<8x128xf32>
      %162 = arith.mulf %59, %161 : vector<8x128xf32>
      %163 = arith.addf %160, %162 : vector<8x128xf32>
      %164 = vector.broadcast %18 : f32 to vector<8x128xf32>
      %165 = arith.mulf %62, %164 : vector<8x128xf32>
      %166 = arith.addf %163, %165 : vector<8x128xf32>
      %167 = vector.broadcast %19 : f32 to vector<8x128xf32>
      %168 = arith.mulf %65, %167 : vector<8x128xf32>
      %169 = arith.addf %166, %168 : vector<8x128xf32>
      %170 = vector.broadcast %28 : f32 to vector<8x128xf32>
      %171 = arith.addf %169, %170 : vector<8x128xf32>
      %cst_99 = arith.constant 0.000000e+00 : f32
      %172 = vector.broadcast %cst_99 : f32 to vector<8x128xf32>
      %173 = arith.maximumf %171, %172 : vector<8x128xf32>
      %174 = vector.broadcast %34 : f32 to vector<8x128xf32>
      %175 = arith.mulf %173, %174 : vector<8x128xf32>
      %176 = arith.addf %152, %175 : vector<8x128xf32>
      %177 = vector.broadcast %40 : f32 to vector<8x128xf32>
      %178 = arith.mulf %173, %177 : vector<8x128xf32>
      %179 = arith.addf %155, %178 : vector<8x128xf32>
      %180 = vector.broadcast %46 : f32 to vector<8x128xf32>
      %181 = arith.mulf %173, %180 : vector<8x128xf32>
      %182 = arith.addf %158, %181 : vector<8x128xf32>
      %183 = vector.broadcast %20 : f32 to vector<8x128xf32>
      %184 = arith.mulf %56, %183 : vector<8x128xf32>
      %185 = vector.broadcast %21 : f32 to vector<8x128xf32>
      %186 = arith.mulf %59, %185 : vector<8x128xf32>
      %187 = arith.addf %184, %186 : vector<8x128xf32>
      %188 = vector.broadcast %22 : f32 to vector<8x128xf32>
      %189 = arith.mulf %62, %188 : vector<8x128xf32>
      %190 = arith.addf %187, %189 : vector<8x128xf32>
      %191 = vector.broadcast %23 : f32 to vector<8x128xf32>
      %192 = arith.mulf %65, %191 : vector<8x128xf32>
      %193 = arith.addf %190, %192 : vector<8x128xf32>
      %194 = vector.broadcast %29 : f32 to vector<8x128xf32>
      %195 = arith.addf %193, %194 : vector<8x128xf32>
      %cst_100 = arith.constant 0.000000e+00 : f32
      %196 = vector.broadcast %cst_100 : f32 to vector<8x128xf32>
      %197 = arith.maximumf %195, %196 : vector<8x128xf32>
      %198 = vector.broadcast %35 : f32 to vector<8x128xf32>
      %199 = arith.mulf %197, %198 : vector<8x128xf32>
      %200 = arith.addf %176, %199 : vector<8x128xf32>
      %201 = vector.broadcast %41 : f32 to vector<8x128xf32>
      %202 = arith.mulf %197, %201 : vector<8x128xf32>
      %203 = arith.addf %179, %202 : vector<8x128xf32>
      %204 = vector.broadcast %47 : f32 to vector<8x128xf32>
      %205 = arith.mulf %197, %204 : vector<8x128xf32>
      %206 = arith.addf %182, %205 : vector<8x128xf32>
      %207 = vector.broadcast %48 : f32 to vector<8x128xf32>
      %208 = arith.addf %200, %207 : vector<8x128xf32>
      %c0_101 = arith.constant 0 : index
      %209 = arith.index_cast %53 : i32 to index
      %c0_102 = arith.constant 0 : index
      %210 = vector.load %arg6[%c0_101, %209, %c0_102] : memref<3x40x128xf32, #tpu.memory_space<vmem>>, vector<1x8x128xf32>
      %211 = vector.shape_cast %210 : vector<1x8x128xf32> to vector<8x128xf32>
      %212 = vector.shape_cast %208 : vector<8x128xf32> to vector<1x8x128xf32>
      tpu.vector_store %arg6[%c0_101, %209, %c0_102], %212 {strides = array<i32>} : memref<3x40x128xf32, #tpu.memory_space<vmem>>, vector<1x8x128xf32>,
      %213 = vector.broadcast %49 : f32 to vector<8x128xf32>
      %214 = arith.addf %203, %213 : vector<8x128xf32>
      %c1_103 = arith.constant 1 : index
      %215 = arith.index_cast %53 : i32 to index
      %c0_104 = arith.constant 0 : index
      %216 = vector.load %arg6[%c1_103, %215, %c0_104] : memref<3x40x128xf32, #tpu.memory_space<vmem>>, vector<1x8x128xf32>
      %217 = vector.shape_cast %216 : vector<1x8x128xf32> to vector<8x128xf32>
      %218 = vector.shape_cast %214 : vector<8x128xf32> to vector<1x8x128xf32>
      tpu.vector_store %arg6[%c1_103, %215, %c0_104], %218 {strides = array<i32>} : memref<3x40x128xf32, #tpu.memory_space<vmem>>, vector<1x8x128xf32>,
      %219 = vector.broadcast %50 : f32 to vector<8x128xf32>
      %220 = arith.addf %206, %219 : vector<8x128xf32>
      %c2_105 = arith.constant 2 : index
      %221 = arith.index_cast %53 : i32 to index
      %c0_106 = arith.constant 0 : index
      %222 = vector.load %arg6[%c2_105, %221, %c0_106] : memref<3x40x128xf32, #tpu.memory_space<vmem>>, vector<1x8x128xf32>
      %223 = vector.shape_cast %222 : vector<1x8x128xf32> to vector<8x128xf32>
      %224 = vector.shape_cast %220 : vector<8x128xf32> to vector<1x8x128xf32>
      tpu.vector_store %arg6[%c2_105, %221, %c0_106], %224 {strides = array<i32>} : memref<3x40x128xf32, #tpu.memory_space<vmem>>, vector<1x8x128xf32>,
    }
    %c5_i32_87 = arith.constant 5 : i32
    return
  }
  func.func @transform_0(%arg0: i32) -> (i32, i32) {
    %c0_i32 = arith.constant 0 : i32
    %c0_i32_0 = arith.constant 0 : i32
    %c0_i32_1 = arith.constant 0 : i32
    return %c0_i32, %c0_i32_0 : i32, i32
  }
  func.func @transform_1(%arg0: i32) -> i32 {
    %c0_i32 = arith.constant 0 : i32
    %c0_i32_0 = arith.constant 0 : i32
    return %c0_i32 : i32
  }
  func.func @transform_2(%arg0: i32) -> (i32, i32) {
    %c0_i32 = arith.constant 0 : i32
    %c0_i32_0 = arith.constant 0 : i32
    %c0_i32_1 = arith.constant 0 : i32
    return %c0_i32, %c0_i32_0 : i32, i32
  }
  func.func @transform_3(%arg0: i32) -> i32 {
    %c0_i32 = arith.constant 0 : i32
    %c0_i32_0 = arith.constant 0 : i32
    return %c0_i32 : i32
  }
  func.func @transform_4(%arg0: i32) -> (i32, i32, i32) {
    %c0_i32 = arith.constant 0 : i32
    %c0_i32_0 = arith.constant 0 : i32
    %c0_i32_1 = arith.constant 0 : i32
    return %c0_i32, %arg0, %c0_i32_0 : i32, i32, i32
  }
  func.func @transform_5(%arg0: i32) -> (i32, i32, i32) {
    %c0_i32 = arith.constant 0 : i32
    %c0_i32_0 = arith.constant 0 : i32
    %c0_i32_1 = arith.constant 0 : i32
    return %c0_i32, %arg0, %c0_i32_0 : i32, i32, i32
  }
}

</mosaic_0001>

<llo_original>
// kernel: mlp_forward.1
$region0: #{mlp_forward.1}
  #allocation0 [shape = 'u32[]', space=smem, size = 0x4, offset = 0x4, fixed_abs, tag = 'smem constant byte address 0x4 - core index']
  #allocation1 [shape = 'u32[144,128]{1,0:T(1,128)}', space=vmem, size = 0x12000, scoped, tag = 'internal scratch']
  %s0 = inlined_call_operand.vmem [shape: f32[6,4], index: 0, kind: input, shape index: {}]
  %s1 = inlined_call_operand.vmem [shape: f32[6], index: 1, kind: input, shape index: {}]
  %s2 = inlined_call_operand.vmem [shape: f32[3,6], index: 2, kind: input, shape index: {}]
  %s3 = inlined_call_operand.vmem [shape: f32[3], index: 3, kind: input, shape index: {}]
  %s4 = inlined_call_operand.vmem [shape: f32[4,80,128], index: 4, kind: input, shape index: {}]
  %s5 = inlined_call_operand.vmem [shape: f32[3,80,128], index: 5, kind: output, shape index: {}]
  %s6 = sld [smem:[#allocation0]]
  $region148: #{mlp_forward.1} parent=0
    _
  %s8 = ssub.s32 1, %s6
  %s9 = scalar_select 0, %s8, %s6
  $region1: #{mlp_forward.1} parent=0
    #allocation2 [shape = 'u8[4096]{0}', space=smem, size = 0x1000, scoped, tag = 'input window, operand 0, single buffered']
    #allocation3 [shape = 's32[2]{0}', space=sflag, size = 0x8, scoped, tag = 'scoped memory for mlp_forward.1']
    #allocation4 [shape = 'u8[512]{0}', space=smem, size = 0x200, scoped, tag = 'input window, operand 1, single buffered']
    #allocation5 [shape = 's32[1]{0}', space=sflag, size = 0x4, scoped, tag = 'scoped memory for mlp_forward.1']
    #allocation6 [shape = 'u8[2048]{0}', space=smem, size = 0x800, scoped, tag = 'input window, operand 2, single buffered']
    #allocation7 [shape = 'u8[512]{0}', space=smem, size = 0x200, scoped, tag = 'input window, operand 3, single buffered']
    #allocation8 [shape = 's32[1]{0}', space=sflag, size = 0x4, scoped, tag = 'scoped memory for mlp_forward.1']
    #allocation9 [shape = 'u8[163840]{0}', space=vmem, size = 0x28000, scoped, tag = 'input window, operand 4']
    #allocation10 [shape = 'u8[122880]{0}', space=vmem, size = 0x1e000, scoped, tag = 'output window, operand 0']
    %10 = vsyncpa [#allocation3], 0
    %11 = vsyncpa [#allocation5], 0
    %12 = vsyncpa [#allocation8], 0
    loop: start=0, step=1, limit=4
    $region2: #{mlp_forward.1} parent=1 // loop_pre_header
      _
    $region3: #{mlp_forward.1} parent=1 // loop_header
      %s14 = sphi 0, %s18
      %p15 = scmp.ge.s32.totalorder %s14, 4
      %s22 = sphi 0, %s22
      %s24 = sphi 0, %s22
      %s25 = sphi 0, %s24
      %s39 = sphi 0, %s25
      %s43 = sphi 0, %s43
      %s45 = sphi 0, %s43
      %s46 = sphi 0, %s45
      %s60 = sphi 0, %s46
      %s64 = sphi 0, %s64
      %s66 = sphi 0, %s64
      %s67 = sphi 0, %s66
      %s81 = sphi 0, %s67
      %s85 = sphi 0, %s85
      %s87 = sphi 0, %s85
      %s88 = sphi 0, %s87
      %s102 = sphi 0, %s88
      %s108 = sphi 0, %s110
      %s111 = sphi 0, %s108
      %s112 = sphi 0, %s111
      %s128 = sphi 0, %s112
      %s134 = sphi 0, %s136
      %s137 = sphi 0, %s134
      %s138 = sphi 0, %s137
      %s154 = sphi 0, %s138
    $region4: #{mlp_forward.1} parent=1 // loop_header_branch
      %17 = sbr.rel (%p15) target = $region8
    $region5: #{mlp_forward.1} parent=1 // loop_body
      %s19 = ssub.s32 %s14, 1
      %s20 = ssub.s32 %s14, 2
      %s21 = sadd.s32 %s14, 1
      %s23 = sadd.s32 %s22, 1
      %p26 = scmp.eq.s32.totalorder %s14, 1
      %p27 = scmp.ne.s32.totalorder %s22, %s24
      %p28 = scmp.eq.s32.totalorder %s14, 0
      %p29 = por %p27, %p28
      %p30 = scmp.ne.s32.totalorder %s22, %s24
      %p31 = scmp.eq.s32.totalorder %s19, 1
      %p32 = por %p30, %p31
      %p33 = scmp.ne.s32.totalorder %s24, %s25
      %p34 = scmp.eq.s32.totalorder %s19, 0
      %p35 = por %p33, %p34
      %p36 = scmp.ne.s32.totalorder %s24, %s25
      %p37 = scmp.eq.s32.totalorder %s20, 1
      %p38 = por %p36, %p37
      %p40 = scmp.ne.s32.totalorder %s25, %s39
      %p41 = scmp.eq.s32.totalorder %s20, 0
      %p42 = por %p40, %p41
      %s44 = sadd.s32 %s43, 1
      %p47 = scmp.eq.s32.totalorder %s14, 1
      %p48 = scmp.ne.s32.totalorder %s43, %s45
      %p49 = scmp.eq.s32.totalorder %s14, 0
      %p50 = por %p48, %p49
      %p51 = scmp.ne.s32.totalorder %s43, %s45
      %p52 = scmp.eq.s32.totalorder %s19, 1
      %p53 = por %p51, %p52
      %p54 = scmp.ne.s32.totalorder %s45, %s46
      %p55 = scmp.eq.s32.totalorder %s19, 0
      %p56 = por %p54, %p55
      %p57 = scmp.ne.s32.totalorder %s45, %s46
      %p58 = scmp.eq.s32.totalorder %s20, 1
      %p59 = por %p57, %p58
      %p61 = scmp.ne.s32.totalorder %s46, %s60
      %p62 = scmp.eq.s32.totalorder %s20, 0
      %p63 = por %p61, %p62
      %s65 = sadd.s32 %s64, 1
      %p68 = scmp.eq.s32.totalorder %s14, 1
      %p69 = scmp.ne.s32.totalorder %s64, %s66
      %p70 = scmp.eq.s32.totalorder %s14, 0
      %p71 = por %p69, %p70
      %p72 = scmp.ne.s32.totalorder %s64, %s66
      %p73 = scmp.eq.s32.totalorder %s19, 1
      %p74 = por %p72, %p73
      %p75 = scmp.ne.s32.totalorder %s66, %s67
      %p76 = scmp.eq.s32.totalorder %s19, 0
      %p77 = por %p75, %p76
      %p78 = scmp.ne.s32.totalorder %s66, %s67
      %p79 = scmp.eq.s32.totalorder %s20, 1
      %p80 = por %p78, %p79
      %p82 = scmp.ne.s32.totalorder %s67, %s81
      %p83 = scmp.eq.s32.totalorder %s20, 0
      %p84 = por %p82, %p83
      %s86 = sadd.s32 %s85, 1
      %p89 = scmp.eq.s32.totalorder %s14, 1
      %p90 = scmp.ne.s32.totalorder %s85, %s87
      %p91 = scmp.eq.s32.totalorder %s14, 0
      %p92 = por %p90, %p91
      %p93 = scmp.ne.s32.totalorder %s85, %s87
      %p94 = scmp.eq.s32.totalorder %s19, 1
      %p95 = por %p93, %p94
      %p96 = scmp.ne.s32.totalorder %s87, %s88
      %p97 = scmp.eq.s32.totalorder %s19, 0
      %p98 = por %p96, %p97
      %p99 = scmp.ne.s32.totalorder %s87, %s88
      %p100 = scmp.eq.s32.totalorder %s20, 1
      %p101 = por %p99, %p100
      %p103 = scmp.ne.s32.totalorder %s88, %s102
      %p104 = scmp.eq.s32.totalorder %s20, 0
      %p105 = por %p103, %p104
      %s106 = ssub.s32 %s14, %s21
      %p107 = scmp.eq.s32.totalorder %s106, 0
      %s109 = sadd.s32 %s108, 1
      %s110 = scalar_select %p107, %s108, %s109
      %p113 = pneg %p107
      %p114 = scmp.eq.s32.totalorder %s14, 1
      %p115 = por %p113, %p114
      %p116 = scmp.ne.s32.totalorder %s108, %s111
      %p117 = scmp.eq.s32.totalorder %s14, 0
      %p118 = por %p116, %p117
      %p119 = scmp.ne.s32.totalorder %s108, %s111
      %p120 = scmp.eq.s32.totalorder %s19, 1
      %p121 = por %p119, %p120
      %p122 = scmp.ne.s32.totalorder %s111, %s112
      %p123 = scmp.eq.s32.totalorder %s19, 0
      %p124 = por %p122, %p123
      %p125 = scmp.ne.s32.totalorder %s111, %s112
      %p126 = scmp.eq.s32.totalorder %s20, 1
      %p127 = por %p125, %p126
      %p129 = scmp.ne.s32.totalorder %s112, %s128
      %p130 = scmp.eq.s32.totalorder %s20, 0
      %p131 = por %p129, %p130
      %s132 = ssub.s32 %s14, %s21
      %p133 = scmp.eq.s32.totalorder %s132, 0
      %s135 = sadd.s32 %s134, 1
      %s136 = scalar_select %p133, %s134, %s135
      %p139 = pneg %p133
      %p140 = scmp.eq.s32.totalorder %s14, 1
      %p141 = por %p139, %p140
      %p142 = scmp.ne.s32.totalorder %s134, %s137
      %p143 = scmp.eq.s32.totalorder %s14, 0
      %p144 = por %p142, %p143
      %p145 = scmp.ne.s32.totalorder %s134, %s137
      %p146 = scmp.eq.s32.totalorder %s19, 1
      %p147 = por %p145, %p146
      %p148 = scmp.ne.s32.totalorder %s137, %s138
      %p149 = scmp.eq.s32.totalorder %s19, 0
      %p150 = por %p148, %p149
      %p151 = scmp.ne.s32.totalorder %s137, %s138
      %p152 = scmp.eq.s32.totalorder %s20, 1
      %p153 = por %p151, %p152
      %p155 = scmp.ne.s32.totalorder %s138, %s154
      %p156 = scmp.eq.s32.totalorder %s20, 0
      %p157 = por %p155, %p156
      %p158 = scmp.le.s32.totalorder 1, %s14
      %p159 = scmp.lt.s32.totalorder %s14, 3
      %p160 = pnand %p158, %p159
      %p161 = pneg %p160
      // Predicated region
      $region9: #{mlp_forward.1} parent=5 // pred_check
        _
      $region10: #{mlp_forward.1} parent=5 // pred_check_branch
        %163 = sbr.rel (%p160) target = $region12
      $region11: #{mlp_forward.1} parent=5 // pred_region
        %s164 = ssub.s32 %s14, 1
        // Predicated region
        $region13: #{mlp_forward.1} parent=11 // pred_check
          %p165 = pneg %p35
        $region14: #{mlp_forward.1} parent=11 // pred_check_branch
          %167 = sbr.rel (%p165) target = $region16
        $region15: #{mlp_forward.1} parent=11 // pred_region
          %s169 = ssub.s32 128, 128
          %170 = vsyncadd [#allocation3], %s169
          %s172 = sshll.u32 %s0, 4
          %s173 = int_to_ptr.vmem [resolvable:$true] %s172
          %175 = dma.vmem_to_smem %s173, 128, [#allocation2], [#allocation3]
        $region16: #{mlp_forward.1} parent=11 // pred_fallthru
          _
        // Predicated region
        $region17: #{mlp_forward.1} parent=11 // pred_check
          %p176 = pneg %p56
        $region18: #{mlp_forward.1} parent=11 // pred_check_branch
          %178 = sbr.rel (%p176) target = $region20
        $region19: #{mlp_forward.1} parent=11 // pred_region
          %s180 = ssub.s32 16, 16
          %181 = vsyncadd [#allocation5], %s180
          %s183 = sshll.u32 %s1, 4
          %s184 = int_to_ptr.vmem [resolvable:$true] %s183
          %186 = dma.vmem_to_smem %s184, 16, [#allocation4], [#allocation5]
        $region20: #{mlp_forward.1} parent=11 // pred_fallthru
          _
        // Predicated region
        $region21: #{mlp_forward.1} parent=11 // pred_check
          %p187 = pneg %p77
        $region22: #{mlp_forward.1} parent=11 // pred_check_branch
          %189 = sbr.rel (%p187) target = $region24
        $region23: #{mlp_forward.1} parent=11 // pred_region
          %s191 = ssub.s32 64, 64
          %192 = vsyncadd [#allocation5], %s191
          %s194 = sshll.u32 %s2, 4
          %s195 = int_to_ptr.vmem [resolvable:$true] %s194
          %197 = dma.vmem_to_smem %s195, 64, [#allocation6], [#allocation5]
        $region24: #{mlp_forward.1} parent=11 // pred_fallthru
          _
        // Predicated region
        $region25: #{mlp_forward.1} parent=11 // pred_check
          %p198 = pneg %p98
        $region26: #{mlp_forward.1} parent=11 // pred_check_branch
          %200 = sbr.rel (%p198) target = $region28
        $region27: #{mlp_forward.1} parent=11 // pred_region
          %s202 = ssub.s32 16, 16
          %203 = vsyncadd [#allocation8], %s202
          %s205 = sshll.u32 %s3, 4
          %s206 = int_to_ptr.vmem [resolvable:$true] %s205
          %208 = dma.vmem_to_smem %s206, 16, [#allocation7], [#allocation8]
        $region28: #{mlp_forward.1} parent=11 // pred_fallthru
          _
      $region12: #{mlp_forward.1} parent=5 // pred_fallthru
        _
      %p209 = scmp.lt.s32.totalorder %s14, 2
      // Predicated region
      $region29: #{mlp_forward.1} parent=5 // pred_check
        %p210 = pneg %p209
      $region30: #{mlp_forward.1} parent=5 // pred_check_branch
        %212 = sbr.rel (%p210) target = $region32
      $region31: #{mlp_forward.1} parent=5 // pred_region
        // Predicated region
        $region33: #{mlp_forward.1} parent=31 // pred_check
          %p213 = pneg %p118
        $region34: #{mlp_forward.1} parent=31 // pred_check_branch
          %215 = sbr.rel (%p213) target = $region36
        $region35: #{mlp_forward.1} parent=31 // pred_region
          %s216 = sand.u32 %s108, 1
          %s217 = sand.u32 %s108, 1
          %s218 = smul.addr %s217, 160
          %s219 = scalar_lea.vmem [#allocation9], %s218
          %s220 = smul.u32 5, %s14
          %s221 = smul.addr %s220, 8
          %s222 = scalar_lea.vmem %s4, %s221
          // Predicated region
          $region37: #{mlp_forward.1} parent=35 // pred_check
            _
          $region38: #{mlp_forward.1} parent=35 // pred_check_branch
            %224 = sbr.rel (0) target = $region40
          $region39: #{mlp_forward.1} parent=35 // pred_region
            // Predicated region
            $region41: #{mlp_forward.1} parent=39 // pred_check
              _
            $region42: #{mlp_forward.1} parent=39 // pred_check_branch
              %226 = sbr.rel (0) target = $region44
            $region43: #{mlp_forward.1} parent=39 // pred_region
              // Predicated region
              $region56: #{mlp_forward.1} parent=43 // pred_check
                _
              $region57: #{mlp_forward.1} parent=43 // pred_check_branch
                %279 = sbr.rel (0) target = $region59
              $region58: #{mlp_forward.1} parent=43 // pred_region
                loop: start=0, step=1, limit=1
                $region60: #{mlp_forward.1} parent=58 // loop_pre_header
                  _
                $region61: #{mlp_forward.1} parent=58 // loop_header
                  %s281 = sphi 0, %s285
                  %p282 = scmp.ge.s32.totalorder %s281, 1
                  %s286 = sphi %s222, %s222
                  %s287 = sphi %s219, %s219
                $region62: #{mlp_forward.1} parent=58 // loop_header_branch
                  %284 = sbr.rel (%p282) target = $region66
                $region63: #{mlp_forward.1} parent=58 // loop_body
                  %v288 = vld [vmem:[%s286] sm:$0xff]
                  %289 = vst [vmem:[%s287] sm:$0xff] %v288
                  %v290 = vld [vmem:[%s286 + $0x8] sm:$0xff]
                  %291 = vst [vmem:[%s287 + $0x8] sm:$0xff] %v290
                  %v292 = vld [vmem:[%s286 + $0x10] sm:$0xff]
                  %293 = vst [vmem:[%s287 + $0x10] sm:$0xff] %v292
                  %v294 = vld [vmem:[%s286 + $0x18] sm:$0xff]
                  %295 = vst [vmem:[%s287 + $0x18] sm:$0xff] %v294
                  %v296 = vld [vmem:[%s286 + $0x20] sm:$0xff]
                  %297 = vst [vmem:[%s287 + $0x20] sm:$0xff] %v296
                  %v298 = vld [vmem:[%s286 + $0x50] sm:$0xff]
                  %299 = vst [vmem:[%s287 + $0x28] sm:$0xff] %v298
                  %v300 = vld [vmem:[%s286 + $0x58] sm:$0xff]
                  %301 = vst [vmem:[%s287 + $0x30] sm:$0xff] %v300
                  %v302 = vld [vmem:[%s286 + $0x60] sm:$0xff]
                  %303 = vst [vmem:[%s287 + $0x38] sm:$0xff] %v302
                  %v304 = vld [vmem:[%s286 + $0x68] sm:$0xff]
                  %305 = vst [vmem:[%s287 + $0x40] sm:$0xff] %v304
                  %v306 = vld [vmem:[%s286 + $0x70] sm:$0xff]
                  %307 = vst [vmem:[%s287 + $0x48] sm:$0xff] %v306
                  %v308 = vld [vmem:[%s286 + $0xa0] sm:$0xff]
                  %309 = vst [vmem:[%s287 + $0x50] sm:$0xff] %v308
                  %v310 = vld [vmem:[%s286 + $0xa8] sm:$0xff]
                  %311 = vst [vmem:[%s287 + $0x58] sm:$0xff] %v310
                  %v312 = vld [vmem:[%s286 + $0xb0] sm:$0xff]
                  %313 = vst [vmem:[%s287 + $0x60] sm:$0xff] %v312
                  %v314 = vld [vmem:[%s286 + $0xb8] sm:$0xff]
                  %315 = vst [vmem:[%s287 + $0x68] sm:$0xff] %v314
                  %v316 = vld [vmem:[%s286 + $0xc0] sm:$0xff]
                  %317 = vst [vmem:[%s287 + $0x70] sm:$0xff] %v316
                  %v318 = vld [vmem:[%s286 + $0xf0] sm:$0xff]
                  %319 = vst [vmem:[%s287 + $0x78] sm:$0xff] %v318
                  %v320 = vld [vmem:[%s286 + $0xf8] sm:$0xff]
                  %321 = vst [vmem:[%s287 + $0x80] sm:$0xff] %v320
                  %v322 = vld [vmem:[%s286 + $0x100] sm:$0xff]
                  %323 = vst [vmem:[%s287 + $0x88] sm:$0xff] %v322
                  %v324 = vld [vmem:[%s286 + $0x108] sm:$0xff]
                  %325 = vst [vmem:[%s287 + $0x90] sm:$0xff] %v324
                  %v326 = vld [vmem:[%s286 + $0x110] sm:$0xff]
                  %327 = vst [vmem:[%s287 + $0x98] sm:$0xff] %v326
                $region64: #{mlp_forward.1} parent=58 // loop_footer
                  %s285 = sadd.s32 1, %s281
                $region65: #{mlp_forward.1} parent=58 // loop_footer_branch
                  %280 = sbr.rel target = $region61
                $region66: #{mlp_forward.1} parent=58 // loop_exit
                  _
              $region59: #{mlp_forward.1} parent=43 // pred_fallthru
                _
              // Predicated region
              $region67: #{mlp_forward.1} parent=43 // pred_check
                _
              $region68: #{mlp_forward.1} parent=43 // pred_check_branch
                %329 = sbr.rel target = $region70
              $region69: #{mlp_forward.1} parent=43 // pred_region
                _
              $region70: #{mlp_forward.1} parent=43 // pred_fallthru
                _
            $region44: #{mlp_forward.1} parent=39 // pred_fallthru
              _
            // Predicated region
            $region45: #{mlp_forward.1} parent=39 // pred_check
              _
            $region46: #{mlp_forward.1} parent=39 // pred_check_branch
              %228 = sbr.rel target = $region48
            $region47: #{mlp_forward.1} parent=39 // pred_region
              loop: start=0, step=1, limit=1
              $region49: #{mlp_forward.1} parent=47 // loop_pre_header
                _
              $region50: #{mlp_forward.1} parent=47 // loop_header
                %s231 = sphi 0, %s235
                %p232 = scmp.ge.s32.totalorder %s231, 1
                %s236 = sphi %s222, %s222
                %s237 = sphi %s219, %s219
              $region51: #{mlp_forward.1} parent=47 // loop_header_branch
                %234 = sbr.rel (%p232) target = $region55
              $region52: #{mlp_forward.1} parent=47 // loop_body
                %v238 = vld [vmem:[%s236] sm:$0xff]
                %239 = vst [vmem:[%s237] sm:$0xff] %v238
                %v240 = vld [vmem:[%s236 + $0x8] sm:$0xff]
                %241 = vst [vmem:[%s237 + $0x8] sm:$0xff] %v240
                %v242 = vld [vmem:[%s236 + $0x10] sm:$0xff]
                %243 = vst [vmem:[%s237 + $0x10] sm:$0xff] %v242
                %v244 = vld [vmem:[%s236 + $0x18] sm:$0xff]
                %245 = vst [vmem:[%s237 + $0x18] sm:$0xff] %v244
                %v246 = vld [vmem:[%s236 + $0x20] sm:$0xff]
                %247 = vst [vmem:[%s237 + $0x20] sm:$0xff] %v246
                %v248 = vld [vmem:[%s236 + $0x50] sm:$0xff]
                %249 = vst [vmem:[%s237 + $0x28] sm:$0xff] %v248
                %v250 = vld [vmem:[%s236 + $0x58] sm:$0xff]
                %251 = vst [vmem:[%s237 + $0x30] sm:$0xff] %v250
                %v252 = vld [vmem:[%s236 + $0x60] sm:$0xff]
                %253 = vst [vmem:[%s237 + $0x38] sm:$0xff] %v252
                %v254 = vld [vmem:[%s236 + $0x68] sm:$0xff]
                %255 = vst [vmem:[%s237 + $0x40] sm:$0xff] %v254
                %v256 = vld [vmem:[%s236 + $0x70] sm:$0xff]
                %257 = vst [vmem:[%s237 + $0x48] sm:$0xff] %v256
                %v258 = vld [vmem:[%s236 + $0xa0] sm:$0xff]
                %259 = vst [vmem:[%s237 + $0x50] sm:$0xff] %v258
                %v260 = vld [vmem:[%s236 + $0xa8] sm:$0xff]
                %261 = vst [vmem:[%s237 + $0x58] sm:$0xff] %v260
                %v262 = vld [vmem:[%s236 + $0xb0] sm:$0xff]
                %263 = vst [vmem:[%s237 + $0x60] sm:$0xff] %v262
                %v264 = vld [vmem:[%s236 + $0xb8] sm:$0xff]
                %265 = vst [vmem:[%s237 + $0x68] sm:$0xff] %v264
                %v266 = vld [vmem:[%s236 + $0xc0] sm:$0xff]
                %267 = vst [vmem:[%s237 + $0x70] sm:$0xff] %v266
                %v268 = vld [vmem:[%s236 + $0xf0] sm:$0xff]
                %269 = vst [vmem:[%s237 + $0x78] sm:$0xff] %v268
                %v270 = vld [vmem:[%s236 + $0xf8] sm:$0xff]
                %271 = vst [vmem:[%s237 + $0x80] sm:$0xff] %v270
                %v272 = vld [vmem:[%s236 + $0x100] sm:$0xff]
                %273 = vst [vmem:[%s237 + $0x88] sm:$0xff] %v272
                %v274 = vld [vmem:[%s236 + $0x108] sm:$0xff]
                %275 = vst [vmem:[%s237 + $0x90] sm:$0xff] %v274
                %v276 = vld [vmem:[%s236 + $0x110] sm:$0xff]
                %277 = vst [vmem:[%s237 + $0x98] sm:$0xff] %v276
              $region53: #{mlp_forward.1} parent=47 // loop_footer
                %s235 = sadd.s32 1, %s231
              $region54: #{mlp_forward.1} parent=47 // loop_footer_branch
                %230 = sbr.rel target = $region50
              $region55: #{mlp_forward.1} parent=47 // loop_exit
                _
            $region48: #{mlp_forward.1} parent=39 // pred_fallthru
              _
          $region40: #{mlp_forward.1} parent=35 // pred_fallthru
            _
          %330 = vnop
        $region36: #{mlp_forward.1} parent=31 // pred_fallthru
          _
      $region32: #{mlp_forward.1} parent=5 // pred_fallthru
        _
      %p331 = scmp.le.s32.totalorder 1, %s14
      %p332 = scmp.lt.s32.totalorder %s14, 3
      %p333 = pnand %p331, %p332
      %p334 = pneg %p333
      // Predicated region
      $region71: #{mlp_forward.1} parent=5 // pred_check
        _
      $region72: #{mlp_forward.1} parent=5 // pred_check_branch
        %336 = sbr.rel (%p333) target = $region74
      $region73: #{mlp_forward.1} parent=5 // pred_region
        %s337 = ssub.s32 %s14, 1
        // Predicated region
        $region75: #{mlp_forward.1} parent=73 // pred_check
          %p338 = pneg %p35
        $region76: #{mlp_forward.1} parent=73 // pred_check_branch
          %340 = sbr.rel (%p338) target = $region78
        $region77: #{mlp_forward.1} parent=73 // pred_region
          %341 = dma.done [#allocation3], 128
        $region78: #{mlp_forward.1} parent=73 // pred_fallthru
          _
        // Predicated region
        $region79: #{mlp_forward.1} parent=73 // pred_check
          %p342 = pneg %p56
        $region80: #{mlp_forward.1} parent=73 // pred_check_branch
          %344 = sbr.rel (%p342) target = $region82
        $region81: #{mlp_forward.1} parent=73 // pred_region
          %345 = dma.done [#allocation5], 16
        $region82: #{mlp_forward.1} parent=73 // pred_fallthru
          _
        // Predicated region
        $region83: #{mlp_forward.1} parent=73 // pred_check
          %p346 = pneg %p77
        $region84: #{mlp_forward.1} parent=73 // pred_check_branch
          %348 = sbr.rel (%p346) target = $region86
        $region85: #{mlp_forward.1} parent=73 // pred_region
          %349 = dma.done [#allocation5], 64
        $region86: #{mlp_forward.1} parent=73 // pred_fallthru
          _
        // Predicated region
        $region87: #{mlp_forward.1} parent=73 // pred_check
          %p350 = pneg %p98
        $region88: #{mlp_forward.1} parent=73 // pred_check_branch
          %352 = sbr.rel (%p350) target = $region90
        $region89: #{mlp_forward.1} parent=73 // pred_region
          %353 = dma.done [#allocation8], 16
        $region90: #{mlp_forward.1} parent=73 // pred_fallthru
          _
        %s354 = sand.u32 %s111, 1
        %s355 = sand.u32 %s111, 1
        %s356 = smul.addr %s355, 160
        %s357 = scalar_lea.vmem [#allocation9], %s356
        // Predicated region
        $region91: #{mlp_forward.1} parent=73 // pred_check
          %p358 = pneg %p124
        $region92: #{mlp_forward.1} parent=73 // pred_check_branch
          %360 = sbr.rel (%p358) target = $region94
        $region93: #{mlp_forward.1} parent=73 // pred_region
          _
        $region94: #{mlp_forward.1} parent=73 // pred_fallthru
          _
        %361 = sfence
        %p362 = pneg %p35
        %p363 = pneg %p32
        %p364 = pneg %p56
        %p365 = pneg %p53
        %p366 = pneg %p77
        %p367 = pneg %p74
        %p368 = pneg %p98
        %p369 = pneg %p95
        %s370 = sand.u32 %s111, 1
        %s371 = sand.u32 %s111, 1
        %s372 = smul.addr %s371, 160
        %s373 = scalar_lea.vmem [#allocation9], %s372
        %p374 = pneg %p124
        %p375 = pneg %p121
        %p376 = pneg %p150
        %p377 = pneg %p147
        %s378 = sand.u32 %s137, 1
        %s379 = sand.u32 %s137, 1
        %s380 = smul.addr %s379, 120
        %s381 = scalar_lea.vmem [#allocation10], %s380
        %s382 = smul.u32 5, %s19
        %s383 = smul.u32 5, %s19
        %s384 = sld [smem:[#allocation2]]
        %s385 = sld [smem:[#allocation2 + $0x1]]
        %s386 = sld [smem:[#allocation2 + $0x2]]
        %s387 = sld [smem:[#allocation2 + $0x3]]
        %s388 = sld [smem:[#allocation2 + $0x80]]
        %s389 = sld [smem:[#allocation2 + $0x81]]
        %s390 = sld [smem:[#allocation2 + $0x82]]
        %s391 = sld [smem:[#allocation2 + $0x83]]
        %s392 = sld [smem:[#allocation2 + $0x100]]
        %s393 = sld [smem:[#allocation2 + $0x101]]
        %s394 = sld [smem:[#allocation2 + $0x102]]
        %s395 = sld [smem:[#allocation2 + $0x103]]
        %s396 = sld [smem:[#allocation2 + $0x180]]
        %s397 = sld [smem:[#allocation2 + $0x181]]
        %s398 = sld [smem:[#allocation2 + $0x182]]
        %s399 = sld [smem:[#allocation2 + $0x183]]
        %s400 = sld [smem:[#allocation2 + $0x200]]
        %s401 = sld [smem:[#allocation2 + $0x201]]
        %s402 = sld [smem:[#allocation2 + $0x202]]
        %s403 = sld [smem:[#allocation2 + $0x203]]
        %s404 = sld [smem:[#allocation2 + $0x280]]
        %s405 = sld [smem:[#allocation2 + $0x281]]
        %s406 = sld [smem:[#allocation2 + $0x282]]
        %s407 = sld [smem:[#allocation2 + $0x283]]
        %s408 = sld [smem:[#allocation4]]
        %s409 = sld [smem:[#allocation4 + $0x1]]
        %s410 = sld [smem:[#allocation4 + $0x2]]
        %s411 = sld [smem:[#allocation4 + $0x3]]
        %s412 = sld [smem:[#allocation4 + $0x4]]
        %s413 = sld [smem:[#allocation4 + $0x5]]
        %s414 = sld [smem:[#allocation6]]
        %s415 = sld [smem:[#allocation6 + $0x1]]
        %s416 = sld [smem:[#allocation6 + $0x2]]
        %s417 = sld [smem:[#allocation6 + $0x3]]
        %s418 = sld [smem:[#allocation6 + $0x4]]
        %s419 = sld [smem:[#allocation6 + $0x5]]
        %s420 = sld [smem:[#allocation6 + $0x80]]
        %s421 = sld [smem:[#allocation6 + $0x81]]
        %s422 = sld [smem:[#allocation6 + $0x82]]
        %s423 = sld [smem:[#allocation6 + $0x83]]
        %s424 = sld [smem:[#allocation6 + $0x84]]
        %s425 = sld [smem:[#allocation6 + $0x85]]
        %s426 = sld [smem:[#allocation6 + $0x100]]
        %s427 = sld [smem:[#allocation6 + $0x101]]
        %s428 = sld [smem:[#allocation6 + $0x102]]
        %s429 = sld [smem:[#allocation6 + $0x103]]
        %s430 = sld [smem:[#allocation6 + $0x104]]
        %s431 = sld [smem:[#allocation6 + $0x105]]
        %s432 = sld [smem:[#allocation7]]
        %s433 = sld [smem:[#allocation7 + $0x1]]
        %s434 = sld [smem:[#allocation7 + $0x2]]
        loop: start=0, step=1, limit=5
        $region95: #{mlp_forward.1} parent=73 // loop_pre_header
          _
        $region96: #{mlp_forward.1} parent=73 // loop_header
          %s436 = sphi 0, %s440
          %p437 = scmp.ge.s32.totalorder %s436, 5
        $region97: #{mlp_forward.1} parent=73 // loop_header_branch
          %439 = sbr.rel (%p437) target = $region101
        $region98: #{mlp_forward.1} parent=73 // loop_body
          %s441 = smul.u32 %s436, 8
          %s442 = scalar_lea.vmem %s357, %s441 [#allocation9]
          %v443 = vld [vmem:[%s442] sm:$0xff]
          %s444 = sadd.s32 %s441, 40
          %s445 = scalar_lea.vmem %s357, %s444 [#allocation9]
          %v446 = vld [vmem:[%s445] sm:$0xff]
          %s447 = sadd.s32 %s441, 80
          %s448 = scalar_lea.vmem %s357, %s447 [#allocation9]
          %v449 = vld [vmem:[%s448] sm:$0xff]
          %s450 = sadd.s32 %s441, 120
          %s451 = scalar_lea.vmem %s357, %s450 [#allocation9]
          %v452 = vld [vmem:[%s451] sm:$0xff]
          %v453 = vstv %s384
          %v454 = vmul.f32 %v443, %v453
          %v455 = vstv %s385
          %v456 = vmul.f32 %v446, %v455
          %v457 = vadd.f32 %v454, %v456
          %v458 = vstv %s386
          %v459 = vmul.f32 %v449, %v458
          %v460 = vadd.f32 %v457, %v459
          %v461 = vstv %s387
          %v462 = vmul.f32 %v452, %v461
          %v463 = vadd.f32 %v460, %v462
          %v464 = vstv %s408
          %v465 = vadd.f32 %v463, %v464
          %v466 = vmax.f32 %v465, 0.0
          %v467 = vstv %s414
          %v468 = vmul.f32 %v466, %v467
          %v469 = vstv %s420
          %v470 = vmul.f32 %v466, %v469
          %v471 = vstv %s426
          %v472 = vmul.f32 %v466, %v471
          %v473 = vstv %s388
          %v474 = vmul.f32 %v443, %v473
          %v475 = vstv %s389
          %v476 = vmul.f32 %v446, %v475
          %v477 = vadd.f32 %v474, %v476
          %v478 = vstv %s390
          %v479 = vmul.f32 %v449, %v478
          %v480 = vadd.f32 %v477, %v479
          %v481 = vstv %s391
          %v482 = vmul.f32 %v452, %v481
          %v483 = vadd.f32 %v480, %v482
          %v484 = vstv %s409
          %v485 = vadd.f32 %v483, %v484
          %v486 = vmax.f32 %v485, 0.0
          %v487 = vstv %s415
          %v488 = vmul.f32 %v486, %v487
          %v489 = vadd.f32 %v468, %v488
          %v490 = vstv %s421
          %v491 = vmul.f32 %v486, %v490
          %v492 = vadd.f32 %v470, %v491
          %v493 = vstv %s427
          %v494 = vmul.f32 %v486, %v493
          %v495 = vadd.f32 %v472, %v494
          %v496 = vstv %s392
          %v497 = vmul.f32 %v443, %v496
          %v498 = vstv %s393
          %v499 = vmul.f32 %v446, %v498
          %v500 = vadd.f32 %v497, %v499
          %v501 = vstv %s394
          %v502 = vmul.f32 %v449, %v501
          %v503 = vadd.f32 %v500, %v502
          %v504 = vstv %s395
          %v505 = vmul.f32 %v452, %v504
          %v506 = vadd.f32 %v503, %v505
          %v507 = vstv %s410
          %v508 = vadd.f32 %v506, %v507
          %v509 = vmax.f32 %v508, 0.0
          %v510 = vstv %s416
          %v511 = vmul.f32 %v509, %v510
          %v512 = vadd.f32 %v489, %v511
          %v513 = vstv %s422
          %v514 = vmul.f32 %v509, %v513
          %v515 = vadd.f32 %v492, %v514
          %v516 = vstv %s428
          %v517 = vmul.f32 %v509, %v516
          %v518 = vadd.f32 %v495, %v517
          %v519 = vstv %s396
          %v520 = vmul.f32 %v443, %v519
          %v521 = vstv %s397
          %v522 = vmul.f32 %v446, %v521
          %v523 = vadd.f32 %v520, %v522
          %v524 = vstv %s398
          %v525 = vmul.f32 %v449, %v524
          %v526 = vadd.f32 %v523, %v525
          %v527 = vstv %s399
          %v528 = vmul.f32 %v452, %v527
          %v529 = vadd.f32 %v526, %v528
          %v530 = vstv %s411
          %v531 = vadd.f32 %v529, %v530
          %v532 = vmax.f32 %v531, 0.0
          %v533 = vstv %s417
          %v534 = vmul.f32 %v532, %v533
          %v535 = vadd.f32 %v512, %v534
          %v536 = vstv %s423
          %v537 = vmul.f32 %v532, %v536
          %v538 = vadd.f32 %v515, %v537
          %v539 = vstv %s429
          %v540 = vmul.f32 %v532, %v539
          %v541 = vadd.f32 %v518, %v540
          %v542 = vstv %s400
          %v543 = vmul.f32 %v443, %v542
          %v544 = vstv %s401
          %v545 = vmul.f32 %v446, %v544
          %v546 = vadd.f32 %v543, %v545
          %v547 = vstv %s402
          %v548 = vmul.f32 %v449, %v547
          %v549 = vadd.f32 %v546, %v548
          %v550 = vstv %s403
          %v551 = vmul.f32 %v452, %v550
          %v552 = vadd.f32 %v549, %v551
          %v553 = vstv %s412
          %v554 = vadd.f32 %v552, %v553
          %v555 = vmax.f32 %v554, 0.0
          %v556 = vstv %s418
          %v557 = vmul.f32 %v555, %v556
          %v558 = vadd.f32 %v535, %v557
          %v559 = vstv %s424
          %v560 = vmul.f32 %v555, %v559
          %v561 = vadd.f32 %v538, %v560
          %v562 = vstv %s430
          %v563 = vmul.f32 %v555, %v562
          %v564 = vadd.f32 %v541, %v563
          %v565 = vstv %s404
          %v566 = vmul.f32 %v443, %v565
          %v567 = vstv %s405
          %v568 = vmul.f32 %v446, %v567
          %v569 = vadd.f32 %v566, %v568
          %v570 = vstv %s406
          %v571 = vmul.f32 %v449, %v570
          %v572 = vadd.f32 %v569, %v571
          %v573 = vstv %s407
          %v574 = vmul.f32 %v452, %v573
          %v575 = vadd.f32 %v572, %v574
          %v576 = vstv %s413
          %v577 = vadd.f32 %v575, %v576
          %v578 = vmax.f32 %v577, 0.0
          %v579 = vstv %s419
          %v580 = vmul.f32 %v578, %v579
          %v581 = vadd.f32 %v558, %v580
          %v582 = vstv %s425
          %v583 = vmul.f32 %v578, %v582
          %v584 = vadd.f32 %v561, %v583
          %v585 = vstv %s431
          %v586 = vmul.f32 %v578, %v585
          %v587 = vadd.f32 %v564, %v586
          %v588 = vstv %s432
          %v589 = vadd.f32 %v581, %v588
          %s590 = scalar_lea.vmem %s381, %s441 [#allocation10]
          %591 = vst [vmem:[%s590] sm:$0xff] %v589
          %v592 = vstv %s433
          %v593 = vadd.f32 %v584, %v592
          %s594 = scalar_lea.vmem %s381, %s444 [#allocation10]
          %595 = vst [vmem:[%s594] sm:$0xff] %v593
          %v596 = vstv %s434
          %v597 = vadd.f32 %v587, %v596
          %s598 = scalar_lea.vmem %s381, %s447 [#allocation10]
          %599 = vst [vmem:[%s598] sm:$0xff] %v597
        $region99: #{mlp_forward.1} parent=73 // loop_footer
          %s440 = sadd.s32 1, %s436
        $region100: #{mlp_forward.1} parent=73 // loop_footer_branch
          %435 = sbr.rel target = $region96
        $region101: #{mlp_forward.1} parent=73 // loop_exit
          _
        %s600 = sand.u32 %s137, 1
        %s601 = sand.u32 %s137, 1
        %s602 = smul.addr %s601, 120
        %s603 = scalar_lea.vmem [#allocation10], %s602
        // Predicated region
        $region102: #{mlp_forward.1} parent=73 // pred_check
          %p604 = pneg %p147
        $region103: #{mlp_forward.1} parent=73 // pred_check_branch
          %606 = sbr.rel (%p604) target = $region105
        $region104: #{mlp_forward.1} parent=73 // pred_region
          %s607 = smul.u32 5, %s19
          %s608 = smul.addr %s607, 8
          %s609 = scalar_lea.vmem %s5, %s608
          // Predicated region
          $region106: #{mlp_forward.1} parent=104 // pred_check
            _
          $region107: #{mlp_forward.1} parent=104 // pred_check_branch
            %611 = sbr.rel (0) target = $region109
          $region108: #{mlp_forward.1} parent=104 // pred_region
            // Predicated region
            $region110: #{mlp_forward.1} parent=108 // pred_check
              _
            $region111: #{mlp_forward.1} parent=108 // pred_check_branch
              %613 = sbr.rel (0) target = $region113
            $region112: #{mlp_forward.1} parent=108 // pred_region
              // Predicated region
              $region125: #{mlp_forward.1} parent=112 // pred_check
                _
              $region126: #{mlp_forward.1} parent=112 // pred_check_branch
                %656 = sbr.rel (0) target = $region128
              $region127: #{mlp_forward.1} parent=112 // pred_region
                loop: start=0, step=1, limit=1
                $region129: #{mlp_forward.1} parent=127 // loop_pre_header
                  _
                $region130: #{mlp_forward.1} parent=127 // loop_header
                  %s658 = sphi 0, %s662
                  %p659 = scmp.ge.s32.totalorder %s658, 1
                  %s663 = sphi %s603, %s603
                  %s664 = sphi %s609, %s609
                $region131: #{mlp_forward.1} parent=127 // loop_header_branch
                  %661 = sbr.rel (%p659) target = $region135
                $region132: #{mlp_forward.1} parent=127 // loop_body
                  %v665 = vld [vmem:[%s663] sm:$0xff]
                  %666 = vst [vmem:[%s664] sm:$0xff] %v665
                  %v667 = vld [vmem:[%s663 + $0x8] sm:$0xff]
                  %668 = vst [vmem:[%s664 + $0x8] sm:$0xff] %v667
                  %v669 = vld [vmem:[%s663 + $0x10] sm:$0xff]
                  %670 = vst [vmem:[%s664 + $0x10] sm:$0xff] %v669
                  %v671 = vld [vmem:[%s663 + $0x18] sm:$0xff]
                  %672 = vst [vmem:[%s664 + $0x18] sm:$0xff] %v671
                  %v673 = vld [vmem:[%s663 + $0x20] sm:$0xff]
                  %674 = vst [vmem:[%s664 + $0x20] sm:$0xff] %v673
                  %v675 = vld [vmem:[%s663 + $0x28] sm:$0xff]
                  %676 = vst [vmem:[%s664 + $0x50] sm:$0xff] %v675
                  %v677 = vld [vmem:[%s663 + $0x30] sm:$0xff]
                  %678 = vst [vmem:[%s664 + $0x58] sm:$0xff] %v677
                  %v679 = vld [vmem:[%s663 + $0x38] sm:$0xff]
                  %680 = vst [vmem:[%s664 + $0x60] sm:$0xff] %v679
                  %v681 = vld [vmem:[%s663 + $0x40] sm:$0xff]
                  %682 = vst [vmem:[%s664 + $0x68] sm:$0xff] %v681
                  %v683 = vld [vmem:[%s663 + $0x48] sm:$0xff]
                  %684 = vst [vmem:[%s664 + $0x70] sm:$0xff] %v683
                  %v685 = vld [vmem:[%s663 + $0x50] sm:$0xff]
                  %686 = vst [vmem:[%s664 + $0xa0] sm:$0xff] %v685
                  %v687 = vld [vmem:[%s663 + $0x58] sm:$0xff]
                  %688 = vst [vmem:[%s664 + $0xa8] sm:$0xff] %v687
                  %v689 = vld [vmem:[%s663 + $0x60] sm:$0xff]
                  %690 = vst [vmem:[%s664 + $0xb0] sm:$0xff] %v689
                  %v691 = vld [vmem:[%s663 + $0x68] sm:$0xff]
                  %692 = vst [vmem:[%s664 + $0xb8] sm:$0xff] %v691
                  %v693 = vld [vmem:[%s663 + $0x70] sm:$0xff]
                  %694 = vst [vmem:[%s664 + $0xc0] sm:$0xff] %v693
                $region133: #{mlp_forward.1} parent=127 // loop_footer
                  %s662 = sadd.s32 1, %s658
                $region134: #{mlp_forward.1} parent=127 // loop_footer_branch
                  %657 = sbr.rel target = $region130
                $region135: #{mlp_forward.1} parent=127 // loop_exit
                  _
              $region128: #{mlp_forward.1} parent=112 // pred_fallthru
                _
              // Predicated region
              $region136: #{mlp_forward.1} parent=112 // pred_check
                _
              $region137: #{mlp_forward.1} parent=112 // pred_check_branch
                %696 = sbr.rel target = $region139
              $region138: #{mlp_forward.1} parent=112 // pred_region
                _
              $region139: #{mlp_forward.1} parent=112 // pred_fallthru
                _
            $region113: #{mlp_forward.1} parent=108 // pred_fallthru
              _
            // Predicated region
            $region114: #{mlp_forward.1} parent=108 // pred_check
              _
            $region115: #{mlp_forward.1} parent=108 // pred_check_branch
              %615 = sbr.rel target = $region117
            $region116: #{mlp_forward.1} parent=108 // pred_region
              loop: start=0, step=1, limit=1
              $region118: #{mlp_forward.1} parent=116 // loop_pre_header
                _
              $region119: #{mlp_forward.1} parent=116 // loop_header
                %s618 = sphi 0, %s622
                %p619 = scmp.ge.s32.totalorder %s618, 1
                %s623 = sphi %s603, %s603
                %s624 = sphi %s609, %s609
              $region120: #{mlp_forward.1} parent=116 // loop_header_branch
                %621 = sbr.rel (%p619) target = $region124
              $region121: #{mlp_forward.1} parent=116 // loop_body
                %v625 = vld [vmem:[%s623] sm:$0xff]
                %626 = vst [vmem:[%s624] sm:$0xff] %v625
                %v627 = vld [vmem:[%s623 + $0x8] sm:$0xff]
                %628 = vst [vmem:[%s624 + $0x8] sm:$0xff] %v627
                %v629 = vld [vmem:[%s623 + $0x10] sm:$0xff]
                %630 = vst [vmem:[%s624 + $0x10] sm:$0xff] %v629
                %v631 = vld [vmem:[%s623 + $0x18] sm:$0xff]
                %632 = vst [vmem:[%s624 + $0x18] sm:$0xff] %v631
                %v633 = vld [vmem:[%s623 + $0x20] sm:$0xff]
                %634 = vst [vmem:[%s624 + $0x20] sm:$0xff] %v633
                %v635 = vld [vmem:[%s623 + $0x28] sm:$0xff]
                %636 = vst [vmem:[%s624 + $0x50] sm:$0xff] %v635
                %v637 = vld [vmem:[%s623 + $0x30] sm:$0xff]
                %638 = vst [vmem:[%s624 + $0x58] sm:$0xff] %v637
                %v639 = vld [vmem:[%s623 + $0x38] sm:$0xff]
                %640 = vst [vmem:[%s624 + $0x60] sm:$0xff] %v639
                %v641 = vld [vmem:[%s623 + $0x40] sm:$0xff]
                %642 = vst [vmem:[%s624 + $0x68] sm:$0xff] %v641
                %v643 = vld [vmem:[%s623 + $0x48] sm:$0xff]
                %644 = vst [vmem:[%s624 + $0x70] sm:$0xff] %v643
                %v645 = vld [vmem:[%s623 + $0x50] sm:$0xff]
                %646 = vst [vmem:[%s624 + $0xa0] sm:$0xff] %v645
                %v647 = vld [vmem:[%s623 + $0x58] sm:$0xff]
                %648 = vst [vmem:[%s624 + $0xa8] sm:$0xff] %v647
                %v649 = vld [vmem:[%s623 + $0x60] sm:$0xff]
                %650 = vst [vmem:[%s624 + $0xb0] sm:$0xff] %v649
                %v651 = vld [vmem:[%s623 + $0x68] sm:$0xff]
                %652 = vst [vmem:[%s624 + $0xb8] sm:$0xff] %v651
                %v653 = vld [vmem:[%s623 + $0x70] sm:$0xff]
                %654 = vst [vmem:[%s624 + $0xc0] sm:$0xff] %v653
              $region122: #{mlp_forward.1} parent=116 // loop_footer
                %s622 = sadd.s32 1, %s618
              $region123: #{mlp_forward.1} parent=116 // loop_footer_branch
                %617 = sbr.rel target = $region119
              $region124: #{mlp_forward.1} parent=116 // loop_exit
                _
            $region117: #{mlp_forward.1} parent=108 // pred_fallthru
              _
          $region109: #{mlp_forward.1} parent=104 // pred_fallthru
            _
          %697 = vnop
        $region105: #{mlp_forward.1} parent=73 // pred_fallthru
          _
      $region74: #{mlp_forward.1} parent=5 // pred_fallthru
        _
      %p698 = scmp.le.s32.totalorder 2, %s14
      // Predicated region
      $region140: #{mlp_forward.1} parent=5 // pred_check
        %p699 = pneg %p698
      $region141: #{mlp_forward.1} parent=5 // pred_check_branch
        %701 = sbr.rel (%p699) target = $region143
      $region142: #{mlp_forward.1} parent=5 // pred_region
        %s702 = ssub.s32 %s14, 2
        // Predicated region
        $region144: #{mlp_forward.1} parent=142 // pred_check
          %p703 = pneg %p153
        $region145: #{mlp_forward.1} parent=142 // pred_check_branch
          %705 = sbr.rel (%p703) target = $region147
        $region146: #{mlp_forward.1} parent=142 // pred_region
          %s706 = sand.u32 %s138, 1
          %s707 = sand.u32 %s138, 1
          %s708 = smul.addr %s707, 120
          %s709 = scalar_lea.vmem [#allocation10], %s708
        $region147: #{mlp_forward.1} parent=142 // pred_fallthru
          _
      $region143: #{mlp_forward.1} parent=5 // pred_fallthru
        _
    $region6: #{mlp_forward.1} parent=1 // loop_footer
      %s18 = sadd.s32 1, %s14
    $region7: #{mlp_forward.1} parent=1 // loop_footer_branch
      %13 = sbr.rel target = $region3
    $region8: #{mlp_forward.1} parent=1 // loop_exit
      _
    %710 = vsyncpa [#allocation3], 1
    %s711 = scalar_lea.sflag [#allocation3], 1
    %712 = vsyncpa %s711, 1
    %713 = vsyncpa [#allocation5], 1
    %714 = vsyncpa [#allocation8], 1

</llo_original>
